<compile_context>
chip_gen: v7x
topology: tpu7x:2x2x1
jax: 0.10.0
libtpu: 0.0.40
codegen_flags: <defaults>
</compile_context>

<pallas_src>
import functools

import jax
import jax.numpy as jnp
from jax.experimental import pallas as pl
from jax.experimental.pallas import tpu as pltpu


def _simam_kernel(x_ref, o_ref, *, inv_n, inv_hw, e_lambda):
    # x_ref / o_ref: (row_tile, H*W) blocks resident in VMEM.
    x = x_ref[...].astype(jnp.float32)

    # Per-row (== per (b, c) plane) spatial statistics.  Two-pass form is kept
    # on purpose: the kernel is HBM-bound on v5e/v6e, and the two-pass variance
    # has better cancellation behavior than sum(x^2) - hw*mu^2.
    mu = jnp.sum(x, axis=-1, keepdims=True) * inv_hw
    xm = x - mu
    d = xm * xm                                   # (x - mu)^2, reused below
    s = jnp.sum(d, axis=-1, keepdims=True)        # sum over spatial dims

    # One exact reciprocal per row (shape (row_tile, 1)) instead of a broadcast
    # per-element divide — EUP slot stays free for the sigmoid's exp and the
    # numerics match the PyTorch reference within 1e-5.
    inv_denom = pl.reciprocal(4.0 * (s * inv_n + e_lambda), approx=False)
    y = d * inv_denom + 0.5

    # TODO(synk): on v7x (3.2 TB/s HBM) this gate tail can become VALU/EUP
    # bound; computing sigmoid/multiply in bf16 would halve that work, but it
    # breaks the 1e-5 f32 tolerance, so it is left in f32 here.
    o_ref[...] = (x * jax.nn.sigmoid(y)).astype(o_ref.dtype)


def _divisors(n):
    ds = set()
    i = 1
    while i * i <= n:
        if n % i == 0:
            ds.add(i)
            ds.add(n // i)
        i += 1
    return sorted(ds)


def _choose_row_tile(rows, hw, itemsize, target_bytes):
    """Pick a sublane-aligned row tile with ~target_bytes f32 footprint."""
    # Sublane packing multiple: 8 for 32-bit, 16 for 16-bit, 32 for 8-bit.
    sub = {4: 8, 2: 16, 1: 32}.get(itemsize, 8)
    # Budget by the f32 intermediate footprint (kernel upcasts immediately),
    # not the raw input itemsize — keeps bf16/int8 inputs from blowing VMEM.
    row_bytes = max(hw * max(itemsize, 4), 1)
    budget_rows = max(int(target_bytes // row_bytes), 1)

    if rows <= budget_rows:
        # One full-extent block: block dim == array dim is always legal
        # (no sublane-divisibility requirement), and zero extra traffic.
        return rows

    # Preferred path: a sublane-aligned divisor of rows => no padding, no
    # ragged tail, every DMA and store is full-sized.
    cands = [d for d in _divisors(rows) if d % sub == 0 and d <= budget_rows]
    if cands:
        best = max(cands)
        # Prefer an even number of grid steps (v7x megacore: both TensorCores
        # get equal work) as long as the block stays >= half of `best`.
        even = [d for d in cands if (rows // d) % 2 == 0 and 2 * d >= best]
        return max(even) if even else best

    # Last resort: sublane-aligned tile with a ragged last block.  Rows are
    # fully independent, so garbage rows read by the edge block only feed the
    # out-of-bounds outputs that Pallas masks on store.
    return max((budget_rows // sub) * sub, sub)


def simam(x, e_lambda=1e-4, *, target_block_bytes=4 << 20):
    """SimAM forward.  x: (B, C, H, W) array (any float dtype)."""
    b, c, h, w = x.shape
    hw = h * w
    n = float(hw - 1)
    rows = b * c

    x2d = x.reshape(rows, hw)     # free view of the contiguous NCHW layout
    itemsize = jnp.dtype(x.dtype).itemsize

    row_tile = _choose_row_tile(rows, hw, itemsize, target_block_bytes)
    grid = (pl.cdiv(rows, row_tile),)

    # TODO(synk): for non-128-multiple H*W (7x7, 14x14, ...) the stores are
    # partially masked (vst.msk on the last vreg of each row).  Fixing it
    # (lane padding or a (hw, B*C) transpose) costs a full extra HBM pass,
    # which outweighs the store penalty for the shapes this kernel targets.
    # TODO(synk): for extremely large planes (H*W*4 bytes per row approaching
    # the VMEM budget) the hw axis itself would need to be split with an
    # accumulating reduction; not needed for B2CNet feature-map sizes.

    kernel = functools.partial(
        _simam_kernel,
        # H=W=1 gives n=0: PyTorch divides by zero (nan output); we gate by
        # e_lambda instead (saner, but not bit-compatible for that corner).
        inv_n=(1.0 / n) if n != 0.0 else 0.0,
        inv_hw=1.0 / hw,
        e_lambda=float(e_lambda),
    )

    cost = pl.CostEstimate(
        flops=10 * rows * hw,
        transcendentals=rows * hw + rows,          # sigmoid exp + per-row recip
        bytes_accessed=2 * rows * hw * itemsize,   # read x, write out (no padding)
    )

    out2d = pl.pallas_call(
        kernel,
        out_shape=jax.ShapeDtypeStruct((rows, hw), x.dtype),
        grid_spec=pltpu.PrefetchScalarGridSpec(
            num_scalar_prefetch=0,
            grid=grid,
            in_specs=[pl.BlockSpec((row_tile, hw), lambda i: (i, 0))],
            out_specs=pl.BlockSpec((row_tile, hw), lambda i: (i, 0)),
        ),
        compiler_params=pltpu.CompilerParams(
            dimension_semantics=("parallel",),
            # 2 io arrays x 2 pipeline buffers x block (native dtype) plus the
            # f32 temporaries stays well under this on every generation,
            # including v7x's 64 MiB physical VMEM per TensorCore.
            vmem_limit_bytes=48 << 20,
        ),
        cost_estimate=cost,
    )(x2d)

    return out2d.reshape(b, c, h, w)


def _simam_ref(x, e_lambda=1e-4):
    """Pure-JAX reference matching the PyTorch forward exactly."""
    b, c, h, w = x.shape
    n = w * h - 1
    mu = jnp.mean(x, axis=(2, 3), keepdims=True)
    d = (x - mu) ** 2
    y = d / (4.0 * (jnp.sum(d, axis=(2, 3), keepdims=True) / n + e_lambda)) + 0.5
    return x * jax.nn.sigmoid(y)


if __name__ == "__main__":
    # simam_module has no learnable parameters (only the e_lambda hyperparam).
    key = jax.random.PRNGKey(0)
    x = jax.random.normal(key, (2, 4, 16, 16), dtype=jnp.float32)

    out = simam(x, e_lambda=1e-4)
    out = jax.block_until_ready(out)

    ref = _simam_ref(x, e_lambda=1e-4)
    assert out.shape == x.shape and out.dtype == x.dtype
    assert jnp.allclose(out, ref, atol=1e-5, rtol=1e-5)

    print("KERNEL_OK")
</pallas_src>

<mosaic_0001>
module attributes {stable_mosaic.version = 11 : i64} {
  func.func @_simam_kernel(%arg0: i32, %arg1: memref<8x256xf32, #tpu.memory_space<vmem>>, %arg2: memref<8x256xf32, #tpu.memory_space<vmem>>) attributes {dimension_semantics = [#tpu.dimension_semantics<parallel>], iteration_bounds = array<i64: 1>, scalar_prefetch = 0 : i64, scratch_operands = 0 : i64, tpu.core_type = #tpu.core_type<tc>, window_params = [{transform_indices = @transform_0, window_bounds = array<i64: 8, 256>}, {transform_indices = @transform_1, window_bounds = array<i64: 8, 256>}]} {
    %c0 = arith.constant 0 : index
    %c0_0 = arith.constant 0 : index
    %0 = vector.load %arg1[%c0, %c0_0] : memref<8x256xf32, #tpu.memory_space<vmem>>, vector<8x256xf32>
    %cst = arith.constant dense<0.000000e+00> : vector<8xf32>
    %1 = vector.multi_reduction <add>, %0, %cst [1] : vector<8x256xf32> to vector<8xf32>
    %2 = vector.shape_cast %1 : vector<8xf32> to vector<8x1xf32>
    %cst_1 = arith.constant 3.906250e-03 : f32
    %3 = vector.broadcast %cst_1 : f32 to vector<8x1xf32>
    %4 = arith.mulf %2, %3 : vector<8x1xf32>
    %5 = vector.broadcast %4 : vector<8x1xf32> to vector<8x256xf32>
    %6 = arith.subf %0, %5 : vector<8x256xf32>
    %7 = arith.mulf %6, %6 : vector<8x256xf32>
    %cst_2 = arith.constant dense<0.000000e+00> : vector<8xf32>
    %8 = vector.multi_reduction <add>, %7, %cst_2 [1] : vector<8x256xf32> to vector<8xf32>
    %9 = vector.shape_cast %8 : vector<8xf32> to vector<8x1xf32>
    %cst_3 = arith.constant 0.00392156886 : f32
    %10 = vector.broadcast %cst_3 : f32 to vector<8x1xf32>
    %11 = arith.mulf %9, %10 : vector<8x1xf32>
    %cst_4 = arith.constant 9.99999974E-5 : f32
    %12 = vector.broadcast %cst_4 : f32 to vector<8x1xf32>
    %13 = arith.addf %11, %12 : vector<8x1xf32>
    %cst_5 = arith.constant 4.000000e+00 : f32
    %14 = vector.broadcast %cst_5 : f32 to vector<8x1xf32>
    %15 = arith.mulf %14, %13 : vector<8x1xf32>
    %16 = tpu.reciprocal %15 : vector<8x1xf32> -> vector<8x1xf32>
    %17 = vector.broadcast %16 : vector<8x1xf32> to vector<8x256xf32>
    %18 = arith.mulf %7, %17 : vector<8x256xf32>
    %cst_6 = arith.constant 5.000000e-01 : f32
    %19 = vector.broadcast %cst_6 : f32 to vector<8x256xf32>
    %20 = arith.addf %18, %19 : vector<8x256xf32>
    %21 = arith.negf %20 : vector<8x256xf32>
    %22 = math.exp %21 : vector<8x256xf32>
    %cst_7 = arith.constant 1.000000e+00 : f32
    %23 = vector.broadcast %cst_7 : f32 to vector<8x256xf32>
    %24 = arith.addf %23, %22 : vector<8x256xf32>
    %25 = arith.divf %23, %24 : vector<8x256xf32>
    %26 = arith.mulf %0, %25 : vector<8x256xf32>
    %c0_8 = arith.constant 0 : index
    %c0_9 = arith.constant 0 : index
    %27 = vector.load %arg2[%c0_8, %c0_9] : memref<8x256xf32, #tpu.memory_space<vmem>>, vector<8x256xf32>
    tpu.vector_store %arg2[%c0_8, %c0_9], %26 {strides = array<i32>} : memref<8x256xf32, #tpu.memory_space<vmem>>, vector<8x256xf32>,
    return
  }
  func.func @transform_0(%arg0: i32) -> (i32, i32) {
    %c0_i32 = arith.constant 0 : i32
    %c0_i32_0 = arith.constant 0 : i32
    return %arg0, %c0_i32 : i32, i32
  }
  func.func @transform_1(%arg0: i32) -> (i32, i32) {
    %c0_i32 = arith.constant 0 : i32
    %c0_i32_0 = arith.constant 0 : i32
    return %arg0, %c0_i32 : i32, i32
  }
}

</mosaic_0001>

<llo_original>
// kernel: tpu_custom_call.1
$region0: #{tpu_custom_call.1}
  #allocation0 [shape = 'u32[]', space=smem, size = 0x4, offset = 0x4, fixed_abs, tag = 'smem constant byte address 0x4 - core index']
  #allocation1 [shape = 'u32[144,128]{1,0:T(1,128)}', space=vmem, size = 0x12000, scoped, tag = 'internal scratch']
  %s0 = inlined_call_operand.hbm [shape: f32[8,256], index: 0, kind: input, shape index: {}]
  %s1 = inlined_call_operand.hbm [shape: f32[8,256], index: 1, kind: output, shape index: {}]
  %s2 = sld [smem:[#allocation0]]
  $region18: #{tpu_custom_call.1} parent=0
    _
  %s4 = ssub.s32 1, %s2
  %s5 = scalar_select 0, %s4, %s2
  $region1: #{tpu_custom_call.1} parent=0
    #allocation2 [shape = 'u8[8192]{0}', space=vmem, size = 0x2000, scoped, tag = 'input window, operand 0, single buffered']
    #allocation3 [shape = 's32[1]{0}', space=sflag, size = 0x4, scoped, tag = 'scoped memory for tpu_custom_call.1']
    #allocation4 [shape = 's32[1]{0}', space=sflag, size = 0x4, scoped, tag = 'scoped memory for tpu_custom_call.1']
    #allocation5 [shape = 'u8[8192]{0}', space=vmem, size = 0x2000, scoped, tag = 'output window, operand 0, single buffered']
    %6 = vsyncpa [#allocation3], 0
    %7 = vsyncpa [#allocation4], 0
    // Predicated region
    $region2: #{tpu_custom_call.1} parent=1 // pred_check
      _
    $region3: #{tpu_custom_call.1} parent=1 // pred_check_branch
      %9 = sbr.rel (0) target = $region5
    $region4: #{tpu_custom_call.1} parent=1 // pred_region
      %s11 = ssub.s32 256, 256
      %12 = vsyncadd [#allocation3], %s11
      %s14 = sshll.u32 [#allocation2], 4
      %s15 = int_to_ptr.vmem [resolvable:$true] %s14
      %17 = dma.hbm_to_vmem [thread:$0]  %s0, 256, %s15, [#allocation3]
    $region5: #{tpu_custom_call.1} parent=1 // pred_fallthru
      _
    // Predicated region
    $region6: #{tpu_custom_call.1} parent=1 // pred_check
      _
    $region7: #{tpu_custom_call.1} parent=1 // pred_check_branch
      %19 = sbr.rel (0) target = $region9
    $region8: #{tpu_custom_call.1} parent=1 // pred_region
      %20 = dma.done [#allocation3], 256
    $region9: #{tpu_custom_call.1} parent=1 // pred_fallthru
      _
    %v21 = vld [vmem:[#allocation2] sm:$0xff]
    %v22 = vld [vmem:[#allocation2 + $0x8] sm:$0xff]
    %v23 = vadd.f32 %v21, %v22
    %24 = vadd.xlane.f32.xlu0 %v23
    %v25 = vpop.xlane.xlu0 %24
    %v26 = vmul.f32 %v25, 0.00390625
    %v27 = vsub.f32 %v21, %v26
    %v28 = vsub.f32 %v22, %v26
    %v29 = vmul.f32 %v27, %v27
    %v30 = vmul.f32 %v28, %v28
    %v31 = vadd.f32 %v29, %v30
    %32 = vadd.xlane.f32.xlu0 %v31
    %v33 = vpop.xlane.xlu0 %32
    %v34 = vmul.f32 %v33, 0.003921569
    %v35 = vadd.f32 %v34, 0.0001
    %v36 = vmul.f32 %v35, 4.0
    %v37 = vrcp.pop %v36
    %v38 = vmul.f32 %v29, %v37
    %v39 = vmul.f32 %v30, %v37
    %v40 = vadd.f32 %v38, 0.5
    %v41 = vadd.f32 %v39, 0.5
    %v42 = vxor.u32 %v40, 2147483648
    %v43 = vxor.u32 %v41, 2147483648
    %v44 = vmul.f32 %v42, 1.442695
    %v45 = vpow.pop %v44
    %v46 = vmul.f32 %v43, 1.442695
    %v47 = vpow.pop %v46
    %v48 = vadd.f32 %v45, 1.0
    %v49 = vadd.f32 %v47, 1.0
    %v50 = vrcp.pop %v48
    %v51 = vmul.f32 1.0, %v50
    %v52 = vrcp.pop %v49
    %v53 = vmul.f32 1.0, %v52
    %v54 = vmul.f32 %v21, %v51
    %v55 = vmul.f32 %v22, %v53
    %56 = vst [vmem:[#allocation5] sm:$0xff] %v54
    %57 = vst [vmem:[#allocation5 + $0x8] sm:$0xff] %v55
    // Predicated region
    $region10: #{tpu_custom_call.1} parent=1 // pred_check
      _
    $region11: #{tpu_custom_call.1} parent=1 // pred_check_branch
      %59 = sbr.rel (0) target = $region13
    $region12: #{tpu_custom_call.1} parent=1 // pred_region
      %s61 = ssub.s32 256, 256
      %62 = vsyncadd [#allocation4], %s61
      %s64 = sshll.u32 [#allocation5], 4
      %s65 = int_to_ptr.vmem [resolvable:$true] %s64
      %67 = dma.vmem_to_hbm [thread:$0]  %s65, 256, %s1, [#allocation4]
    $region13: #{tpu_custom_call.1} parent=1 // pred_fallthru
      _
    // Predicated region
    $region14: #{tpu_custom_call.1} parent=1 // pred_check
      _
    $region15: #{tpu_custom_call.1} parent=1 // pred_check_branch
      %69 = sbr.rel (0) target = $region17
    $region16: #{tpu_custom_call.1} parent=1 // pred_region
      %70 = dma.done [#allocation4], 256
    $region17: #{tpu_custom_call.1} parent=1 // pred_fallthru
      _
    %71 = vsyncpa [#allocation3], 1
    %72 = vsyncpa [#allocation4], 1

</llo_original>
